<compile_context>
chip_gen: v5e
topology: v5e:2x2
jax: 0.10.0
libtpu: 0.0.40
codegen_flags: <defaults>
</compile_context>

<pallas_src>
import jax
import jax.numpy as jnp
import numpy as np
from jax.experimental import pallas as pl
from jax.experimental.pallas import tpu as pltpu

IN_DIM = 784          # 1*28*28
HID_DIM = 100
OUT_DIM = 10
N_HIDDEN_LAYERS = 100
BN_EPS = 1e-5         # PyTorch BatchNorm1d default

IN_PAD = 896          # 784 -> 7*128 lanes
HID_PAD = 128         # 100 -> 128 lanes
OUT_PAD = 128         # 10  -> 128 lanes


def _network_kernel(x_ref, w_ref, b_ref, gamma_ref, beta_ref,
                    wo_ref, bo_ref, o_ref):
    """Single-step kernel: folded linear chain -> BatchNorm -> ReLU -> output.

    x_ref / w_ref / wo_ref arrive as bf16; matmuls accumulate in f32 on the
    MXU, and all BatchNorm math is f32.  Padded lanes of every operand are
    zero, so padded lanes of h stay exactly zero and never pollute the output.
    """
    # Pre-composed 101-layer linear chain: (B, 896) @ (896, 128), f32 accumulate.
    h = (jnp.dot(x_ref[...], w_ref[...], preferred_element_type=jnp.float32)
         + b_ref[...])

    # BatchNorm1d, training-mode batch statistics (biased variance), in f32.
    # The whole batch lives in this single block, so the statistics are exact.
    mean = jnp.mean(h, axis=0, keepdims=True)
    var = jnp.mean((h - mean) ** 2, axis=0, keepdims=True)
    h = (h - mean) * jax.lax.rsqrt(var + BN_EPS) * gamma_ref[...] + beta_ref[...]

    # ReLU + output layer.
    h = jnp.maximum(h, 0.0)
    o_ref[...] = (jnp.dot(h.astype(jnp.bfloat16), wo_ref[...],
                          preferred_element_type=jnp.float32)
                  + bo_ref[...])


def _pad_to(x, shape):
    return jnp.pad(x, [(0, t - s) for s, t in zip(x.shape, shape)])


def fold_linear_chain(w1, b1, wh, bh):
    """Compose Linear(784,100) followed by 100x Linear(100,100) into one affine map.

    forward() applies no nonlinearity between these layers, so
      (...((x@W1+b1)@Wh0+bh0)...)@Wh99+bh99  ==  x @ W_eff + b_eff.
    Composition runs in f32 at HIGHEST precision, so no bf16 drift accumulates.
    """
    hi = jax.lax.Precision.HIGHEST

    def step(carry, layer):
        W, b = carry
        wi, bi = layer
        return (jnp.dot(W, wi, precision=hi),
                jnp.dot(b, wi, precision=hi) + bi), None

    (w_eff, b_eff), _ = jax.lax.scan(step, (w1, b1[None, :]), (wh, bh))
    return w_eff, b_eff[0]


def network_forward(x, params):
    """x: (B, 1, 28, 28) float32 (NCHW). Returns (B, 10) float32.

    Matches the PyTorch module's forward() (training-mode BatchNorm batch
    statistics; the unused Dropout layer is omitted).
    """
    w1, b1, wh, bh, gamma, beta, wo, bo = params
    B = x.shape[0]
    assert B % 8 == 0, "batch must be a multiple of 8 sublanes for this kernel"

    # Fold the activation-free 101-layer linear chain in f32.  In a real
    # deployment you would cache (w_eff, b_eff) instead of re-folding per call.
    w_eff, b_eff = fold_linear_chain(w1, b1, wh, bh)

    # Glue: flatten + zero-pad to lane-aligned shapes; matmul operands in bf16.
    x_p = _pad_to(x.reshape(B, -1).astype(jnp.float32),
                  (B, IN_PAD)).astype(jnp.bfloat16)
    w_p = _pad_to(w_eff, (IN_PAD, HID_PAD)).astype(jnp.bfloat16)
    b_p = _pad_to(b_eff.reshape(1, HID_DIM), (1, HID_PAD))
    gamma_p = _pad_to(gamma.reshape(1, HID_DIM), (1, HID_PAD))
    beta_p = _pad_to(beta.reshape(1, HID_DIM), (1, HID_PAD))
    wo_p = _pad_to(wo, (HID_PAD, OUT_PAD)).astype(jnp.bfloat16)
    bo_p = _pad_to(bo.reshape(1, OUT_DIM), (1, OUT_PAD))

    # Single grid step, every block constant (DMA'd once, whole array).
    const = lambda shape: pl.BlockSpec(shape, lambda i: (0,) * len(shape))

    out_p = pl.pallas_call(
        _network_kernel,
        out_shape=jax.ShapeDtypeStruct((B, OUT_PAD), jnp.float32),
        grid=(1,),   # whole batch in one block -> exact BatchNorm statistics
        in_specs=[
            const((B, IN_PAD)),         # x (bf16)
            const((IN_PAD, HID_PAD)),   # folded chain weight (bf16)
            const((1, HID_PAD)),        # folded chain bias (f32)
            const((1, HID_PAD)),        # gamma
            const((1, HID_PAD)),        # beta
            const((HID_PAD, OUT_PAD)),  # wo (bf16)
            const((1, OUT_PAD)),        # bo
        ],
        out_specs=const((B, OUT_PAD)),
        compiler_params=pltpu.CompilerParams(
            dimension_semantics=("arbitrary",),
        ),
    )(x_p, w_p, b_p, gamma_p, beta_p, wo_p, bo_p)

    return out_p[:, :OUT_DIM]


def init_params(key):
    """Deterministic synthetic parameters (shapes from the module __init__)."""
    ks = jax.random.split(key, 6)

    def uniform(k, shape, bound):
        return jax.random.uniform(k, shape, jnp.float32, -bound, bound)

    # hidden: Linear(784, 100)   (stored as (in, out); y = x @ W + b)
    w1 = uniform(ks[0], (IN_DIM, HID_DIM), 1.0 / np.sqrt(IN_DIM))
    b1 = uniform(ks[1], (HID_DIM,), 1.0 / np.sqrt(IN_DIM))
    # more_hidden: 100 x Linear(100, 100); variance-preserving scale so the
    # 100-layer linear chain stays numerically sane.
    a = np.sqrt(3.0 / HID_DIM)
    wh = uniform(ks[2], (N_HIDDEN_LAYERS, HID_DIM, HID_DIM), a)
    bh = uniform(ks[3], (N_HIDDEN_LAYERS, HID_DIM), 1.0 / np.sqrt(HID_DIM))
    # batch_norm affine params (PyTorch defaults: gamma=1, beta=0)
    gamma = jnp.ones((HID_DIM,), jnp.float32)
    beta = jnp.zeros((HID_DIM,), jnp.float32)
    # output: Linear(100, 10)
    wo = uniform(ks[4], (HID_DIM, OUT_DIM), 1.0 / np.sqrt(HID_DIM))
    bo = uniform(ks[5], (OUT_DIM,), 1.0 / np.sqrt(HID_DIM))
    return (w1, b1, wh, bh, gamma, beta, wo, bo)


def reference_forward_f32(x, params):
    """Pure-JAX f32 reference with the PyTorch forward semantics (sequential layers)."""
    w1, b1, wh, bh, gamma, beta, wo, bo = params
    hi = jax.lax.Precision.HIGHEST
    h = jnp.dot(x.reshape(x.shape[0], -1), w1, precision=hi) + b1
    h = jax.lax.fori_loop(
        0, N_HIDDEN_LAYERS,
        lambda i, h: jnp.dot(h, wh[i], precision=hi) + bh[i], h)
    mean = jnp.mean(h, axis=0, keepdims=True)
    var = jnp.mean((h - mean) ** 2, axis=0, keepdims=True)
    h = (h - mean) / jnp.sqrt(var + BN_EPS) * gamma + beta
    h = jnp.maximum(h, 0.0)
    return jnp.dot(h, wo, precision=hi) + bo


def reference_forward_matched(x, params):
    """Pure-JAX reference at the kernel's precision: f32-folded chain, bf16
    matmul operands, f32 accumulation, f32 BatchNorm."""
    w1, b1, wh, bh, gamma, beta, wo, bo = params
    w_eff, b_eff = fold_linear_chain(w1, b1, wh, bh)
    bf = jnp.bfloat16
    xb = x.reshape(x.shape[0], -1).astype(bf)
    h = jnp.dot(xb, w_eff.astype(bf), preferred_element_type=jnp.float32) + b_eff
    mean = jnp.mean(h, axis=0, keepdims=True)
    var = jnp.mean((h - mean) ** 2, axis=0, keepdims=True)
    h = (h - mean) * jax.lax.rsqrt(var + BN_EPS) * gamma + beta
    h = jnp.maximum(h, 0.0)
    return (jnp.dot(h.astype(bf), wo.astype(bf),
                    preferred_element_type=jnp.float32) + bo)


if __name__ == "__main__":
    key = jax.random.PRNGKey(0)
    kx, kp = jax.random.split(key)

    # MNIST-shaped input (Linear(784, .) fixes 1x28x28); batch 128 keeps the
    # MXU reasonably fed (any multiple of 8 works).
    B = 128
    x = jax.random.normal(kx, (B, 1, 28, 28), jnp.float32)
    params = init_params(kp)

    out = jax.block_until_ready(network_forward(x, params))
    assert out.shape == (B, OUT_DIM)
    assert bool(jnp.all(jnp.isfinite(out)))

    # Tight check vs. a matched-precision reference (same f32 fold, bf16 matmuls).
    ref_m = jax.block_until_ready(reference_forward_matched(x, params))
    np.testing.assert_allclose(np.asarray(out), np.asarray(ref_m),
                               rtol=5e-3, atol=5e-3)

    # Check vs. the full-f32 PyTorch-semantics reference; only two bf16 matmuls
    # separate the kernel from exact f32 now that the chain is folded in f32.
    ref_f = jax.block_until_ready(reference_forward_f32(x, params))
    np.testing.assert_allclose(np.asarray(out), np.asarray(ref_f),
                               rtol=3e-2, atol=3e-2)

    print("KERNEL_OK")
</pallas_src>

<mosaic_0001>
module attributes {stable_mosaic.version = 11 : i64} {
  func.func @_network_kernel(%arg0: i32, %arg1: memref<128x896xbf16, #tpu.memory_space<vmem>>, %arg2: memref<896x128xbf16, #tpu.memory_space<vmem>>, %arg3: memref<1x128xf32, #tpu.memory_space<vmem>>, %arg4: memref<1x128xf32, #tpu.memory_space<vmem>>, %arg5: memref<1x128xf32, #tpu.memory_space<vmem>>, %arg6: memref<128x128xbf16, #tpu.memory_space<vmem>>, %arg7: memref<1x128xf32, #tpu.memory_space<vmem>>, %arg8: memref<128x128xf32, #tpu.memory_space<vmem>>) attributes {dimension_semantics = [#tpu.dimension_semantics<arbitrary>], iteration_bounds = array<i64: 1>, scalar_prefetch = 0 : i64, scratch_operands = 0 : i64, tpu.core_type = #tpu.core_type<tc>, window_params = [{pipeline_mode = #tpu.pipeline_mode<synchronous>, transform_indices = @transform_0, window_bounds = array<i64: 128, 896>}, {pipeline_mode = #tpu.pipeline_mode<synchronous>, transform_indices = @transform_1, window_bounds = array<i64: 896, 128>}, {pipeline_mode = #tpu.pipeline_mode<synchronous>, transform_indices = @transform_2, window_bounds = array<i64: 1, 128>}, {pipeline_mode = #tpu.pipeline_mode<synchronous>, transform_indices = @transform_3, window_bounds = array<i64: 1, 128>}, {pipeline_mode = #tpu.pipeline_mode<synchronous>, transform_indices = @transform_4, window_bounds = array<i64: 1, 128>}, {pipeline_mode = #tpu.pipeline_mode<synchronous>, transform_indices = @transform_5, window_bounds = array<i64: 128, 128>}, {pipeline_mode = #tpu.pipeline_mode<synchronous>, transform_indices = @transform_6, window_bounds = array<i64: 1, 128>}, {pipeline_mode = #tpu.pipeline_mode<synchronous>, transform_indices = @transform_7, window_bounds = array<i64: 128, 128>}]} {
    %c0 = arith.constant 0 : index
    %c0_0 = arith.constant 0 : index
    %0 = vector.load %arg1[%c0, %c0_0] : memref<128x896xbf16, #tpu.memory_space<vmem>>, vector<128x896xbf16>
    %c0_1 = arith.constant 0 : index
    %c0_2 = arith.constant 0 : index
    %1 = vector.load %arg2[%c0_1, %c0_2] : memref<896x128xbf16, #tpu.memory_space<vmem>>, vector<896x128xbf16>
    %cst = arith.constant dense<0.000000e+00> : vector<128x128xf32>
    %2 = tpu.matmul %0, %1, %cst {dimension_numbers = #tpu.dot_dimension_numbers<[1], [0], [0], [1], [0, 0, 1, 1], [], []>} : vector<128x896xbf16>, vector<896x128xbf16>, vector<128x128xf32> -> vector<128x128xf32>
    %c0_3 = arith.constant 0 : index
    %c0_4 = arith.constant 0 : index
    %3 = vector.load %arg3[%c0_3, %c0_4] : memref<1x128xf32, #tpu.memory_space<vmem>>, vector<1x128xf32>
    %4 = vector.broadcast %3 : vector<1x128xf32> to vector<128x128xf32>
    %5 = arith.addf %2, %4 : vector<128x128xf32>
    %cst_5 = arith.constant dense<0.000000e+00> : vector<128xf32>
    %6 = vector.multi_reduction <add>, %5, %cst_5 [0] : vector<128x128xf32> to vector<128xf32>
    %7 = vector.shape_cast %6 : vector<128xf32> to vector<1x128xf32>
    %cst_6 = arith.constant 1.280000e+02 : f32
    %8 = vector.broadcast %cst_6 : f32 to vector<1x128xf32>
    %9 = arith.divf %7, %8 : vector<1x128xf32>
    %10 = vector.broadcast %9 : vector<1x128xf32> to vector<128x128xf32>
    %11 = arith.subf %5, %10 : vector<128x128xf32>
    %12 = arith.mulf %11, %11 : vector<128x128xf32>
    %cst_7 = arith.constant dense<0.000000e+00> : vector<128xf32>
    %13 = vector.multi_reduction <add>, %12, %cst_7 [0] : vector<128x128xf32> to vector<128xf32>
    %14 = vector.shape_cast %13 : vector<128xf32> to vector<1x128xf32>
    %cst_8 = arith.constant 1.280000e+02 : f32
    %15 = vector.broadcast %cst_8 : f32 to vector<1x128xf32>
    %16 = arith.divf %14, %15 : vector<1x128xf32>
    %17 = vector.broadcast %9 : vector<1x128xf32> to vector<128x128xf32>
    %18 = arith.subf %5, %17 : vector<128x128xf32>
    %cst_9 = arith.constant 9.99999974E-6 : f32
    %19 = vector.broadcast %cst_9 : f32 to vector<1x128xf32>
    %20 = arith.addf %16, %19 : vector<1x128xf32>
    %21 = math.rsqrt %20 : vector<1x128xf32>
    %22 = vector.broadcast %21 : vector<1x128xf32> to vector<128x128xf32>
    %23 = arith.mulf %18, %22 : vector<128x128xf32>
    %c0_10 = arith.constant 0 : index
    %c0_11 = arith.constant 0 : index
    %24 = vector.load %arg4[%c0_10, %c0_11] : memref<1x128xf32, #tpu.memory_space<vmem>>, vector<1x128xf32>
    %25 = vector.broadcast %24 : vector<1x128xf32> to vector<128x128xf32>
    %26 = arith.mulf %23, %25 : vector<128x128xf32>
    %c0_12 = arith.constant 0 : index
    %c0_13 = arith.constant 0 : index
    %27 = vector.load %arg5[%c0_12, %c0_13] : memref<1x128xf32, #tpu.memory_space<vmem>>, vector<1x128xf32>
    %28 = vector.broadcast %27 : vector<1x128xf32> to vector<128x128xf32>
    %29 = arith.addf %26, %28 : vector<128x128xf32>
    %cst_14 = arith.constant 0.000000e+00 : f32
    %30 = vector.broadcast %cst_14 : f32 to vector<128x128xf32>
    %31 = arith.maximumf %29, %30 : vector<128x128xf32>
    %32 = arith.truncf %31 : vector<128x128xf32> to vector<128x128xbf16>
    %c0_15 = arith.constant 0 : index
    %c0_16 = arith.constant 0 : index
    %33 = vector.load %arg6[%c0_15, %c0_16] : memref<128x128xbf16, #tpu.memory_space<vmem>>, vector<128x128xbf16>
    %cst_17 = arith.constant dense<0.000000e+00> : vector<128x128xf32>
    %34 = tpu.matmul %32, %33, %cst_17 {dimension_numbers = #tpu.dot_dimension_numbers<[1], [0], [0], [1], [0, 0, 1, 1], [], []>} : vector<128x128xbf16>, vector<128x128xbf16>, vector<128x128xf32> -> vector<128x128xf32>
    %c0_18 = arith.constant 0 : index
    %c0_19 = arith.constant 0 : index
    %35 = vector.load %arg7[%c0_18, %c0_19] : memref<1x128xf32, #tpu.memory_space<vmem>>, vector<1x128xf32>
    %36 = vector.broadcast %35 : vector<1x128xf32> to vector<128x128xf32>
    %37 = arith.addf %34, %36 : vector<128x128xf32>
    %c0_20 = arith.constant 0 : index
    %c0_21 = arith.constant 0 : index
    %38 = vector.load %arg8[%c0_20, %c0_21] : memref<128x128xf32, #tpu.memory_space<vmem>>, vector<128x128xf32>
    tpu.vector_store %arg8[%c0_20, %c0_21], %37 {strides = array<i32>} : memref<128x128xf32, #tpu.memory_space<vmem>>, vector<128x128xf32>,
    return
  }
  func.func @transform_0(%arg0: i32) -> (i32, i32) {
    %c0_i32 = arith.constant 0 : i32
    %c0_i32_0 = arith.constant 0 : i32
    %c0_i32_1 = arith.constant 0 : i32
    return %c0_i32, %c0_i32_0 : i32, i32
  }
  func.func @transform_1(%arg0: i32) -> (i32, i32) {
    %c0_i32 = arith.constant 0 : i32
    %c0_i32_0 = arith.constant 0 : i32
    %c0_i32_1 = arith.constant 0 : i32
    return %c0_i32, %c0_i32_0 : i32, i32
  }
  func.func @transform_2(%arg0: i32) -> (i32, i32) {
    %c0_i32 = arith.constant 0 : i32
    %c0_i32_0 = arith.constant 0 : i32
    %c0_i32_1 = arith.constant 0 : i32
    return %c0_i32, %c0_i32_0 : i32, i32
  }
  func.func @transform_3(%arg0: i32) -> (i32, i32) {
    %c0_i32 = arith.constant 0 : i32
    %c0_i32_0 = arith.constant 0 : i32
    %c0_i32_1 = arith.constant 0 : i32
    return %c0_i32, %c0_i32_0 : i32, i32
  }
  func.func @transform_4(%arg0: i32) -> (i32, i32) {
    %c0_i32 = arith.constant 0 : i32
    %c0_i32_0 = arith.constant 0 : i32
    %c0_i32_1 = arith.constant 0 : i32
    return %c0_i32, %c0_i32_0 : i32, i32
  }
  func.func @transform_5(%arg0: i32) -> (i32, i32) {
    %c0_i32 = arith.constant 0 : i32
    %c0_i32_0 = arith.constant 0 : i32
    %c0_i32_1 = arith.constant 0 : i32
    return %c0_i32, %c0_i32_0 : i32, i32
  }
  func.func @transform_6(%arg0: i32) -> (i32, i32) {
    %c0_i32 = arith.constant 0 : i32
    %c0_i32_0 = arith.constant 0 : i32
    %c0_i32_1 = arith.constant 0 : i32
    return %c0_i32, %c0_i32_0 : i32, i32
  }
  func.func @transform_7(%arg0: i32) -> (i32, i32) {
    %c0_i32 = arith.constant 0 : i32
    %c0_i32_0 = arith.constant 0 : i32
    %c0_i32_1 = arith.constant 0 : i32
    return %c0_i32, %c0_i32_0 : i32, i32
  }
}

</mosaic_0001>

<llo_original>
// kernel: tpu_custom_call.1
$region0: #{tpu_custom_call.1}
  #allocation0 [shape = 'u32[]', space=smem, size = 0x4, offset = 0x4, fixed_abs, tag = 'smem constant byte address 0x4 - core index']
  #allocation1 [shape = 'u32[72,128]{1,0:T(1,128)}', space=vmem, size = 0x9000, scoped, tag = 'internal scratch']
  %s0 = inlined_call_operand.hbm [shape: bf16[128,896], index: 0, kind: input, shape index: {}]
  %s1 = inlined_call_operand.hbm [shape: bf16[896,128], index: 1, kind: input, shape index: {}]
  %s2 = inlined_call_operand.vmem [shape: f32[1,128], index: 2, kind: input, shape index: {}]
  %s3 = inlined_call_operand.vmem [shape: f32[1,128], index: 3, kind: input, shape index: {}]
  %s4 = inlined_call_operand.vmem [shape: f32[1,128], index: 4, kind: input, shape index: {}]
  %s5 = inlined_call_operand.hbm [shape: bf16[128,128], index: 5, kind: input, shape index: {}]
  %s6 = inlined_call_operand.vmem [shape: f32[1,128], index: 6, kind: input, shape index: {}]
  %s7 = inlined_call_operand.hbm [shape: f32[128,128], index: 7, kind: output, shape index: {}]
  %s8 = sld [smem:[#allocation0]]
  $region50: #{tpu_custom_call.1} parent=0
    _
  %s10 = ssub.s32 1, %s8
  %s11 = scalar_select 0, %s10, %s8
  $region1: #{tpu_custom_call.1} parent=0
    #allocation2 [shape = 'u8[229376]{0}', space=vmem, size = 0x38000, scoped, tag = 'input window, operand 0, single buffered']
    #allocation3 [shape = 's32[1]{0}', space=sflag, size = 0x4, scoped, tag = 'scoped memory for tpu_custom_call.1']
    #allocation4 [shape = 's32[1]{0}', space=sflag, size = 0x4, scoped, tag = 'scoped memory for tpu_custom_call.1']
    #allocation5 [shape = 'u8[229376]{0}', space=vmem, size = 0x38000, scoped, tag = 'input window, operand 1, single buffered']
    #allocation6 [shape = 's32[1]{0}', space=sflag, size = 0x4, scoped, tag = 'scoped memory for tpu_custom_call.1']
    #allocation7 [shape = 'u8[32768]{0}', space=vmem, size = 0x8000, scoped, tag = 'input window, operand 5, single buffered']
    #allocation8 [shape = 'u8[65536]{0}', space=vmem, size = 0x10000, scoped, tag = 'output window, operand 0, single buffered']
    %12 = vsyncpa [#allocation3], 0
    %13 = vsyncpa [#allocation6], 0
    %14 = vsyncpa [#allocation4], 0
    // Predicated region
    $region2: #{tpu_custom_call.1} parent=1 // pred_check
      _
    $region3: #{tpu_custom_call.1} parent=1 // pred_check_branch
      %16 = sbr.rel (0) target = $region5
    $region4: #{tpu_custom_call.1} parent=1 // pred_region
      %18 = vsyncadd [#allocation3], 0
      %s19 = sshll.u32 %s0, 4
      %s20 = int_to_ptr.hbm [resolvable:$true] %s19
      %s21 = sshll.u32 [#allocation2], 4
      %s22 = int_to_ptr.vmem [resolvable:$true] %s21
      %27 = dma.hbm_to_vmem [thread:$0]  %s20, 7168, %s22, [#allocation3], 448, 448, 28
    $region5: #{tpu_custom_call.1} parent=1 // pred_fallthru
      _
    // Predicated region
    $region6: #{tpu_custom_call.1} parent=1 // pred_check
      _
    $region7: #{tpu_custom_call.1} parent=1 // pred_check_branch
      %29 = sbr.rel (0) target = $region9
    $region8: #{tpu_custom_call.1} parent=1 // pred_region
      %31 = vsyncadd [#allocation6], 0
      %s32 = sshll.u32 %s1, 4
      %s33 = int_to_ptr.hbm [resolvable:$true] %s32
      %s34 = sshll.u32 [#allocation5], 4
      %s35 = int_to_ptr.vmem [resolvable:$true] %s34
      %40 = dma.hbm_to_vmem [thread:$0]  %s33, 7168, %s35, [#allocation6], 64, 64, 4
    $region9: #{tpu_custom_call.1} parent=1 // pred_fallthru
      _
    // Predicated region
    $region10: #{tpu_custom_call.1} parent=1 // pred_check
      _
    $region11: #{tpu_custom_call.1} parent=1 // pred_check_branch
      %42 = sbr.rel (0) target = $region13
    $region12: #{tpu_custom_call.1} parent=1 // pred_region
      _
    $region13: #{tpu_custom_call.1} parent=1 // pred_fallthru
      _
    // Predicated region
    $region14: #{tpu_custom_call.1} parent=1 // pred_check
      _
    $region15: #{tpu_custom_call.1} parent=1 // pred_check_branch
      %44 = sbr.rel (0) target = $region17
    $region16: #{tpu_custom_call.1} parent=1 // pred_region
      _
    $region17: #{tpu_custom_call.1} parent=1 // pred_fallthru
      _
    // Predicated region
    $region18: #{tpu_custom_call.1} parent=1 // pred_check
      _
    $region19: #{tpu_custom_call.1} parent=1 // pred_check_branch
      %46 = sbr.rel (0) target = $region21
    $region20: #{tpu_custom_call.1} parent=1 // pred_region
      _
    $region21: #{tpu_custom_call.1} parent=1 // pred_fallthru
      _
    // Predicated region
    $region22: #{tpu_custom_call.1} parent=1 // pred_check
      _
    $region23: #{tpu_custom_call.1} parent=1 // pred_check_branch
      %48 = sbr.rel (0) target = $region25
    $region24: #{tpu_custom_call.1} parent=1 // pred_region
      %50 = vsyncadd [#allocation6], 0
      %s51 = sshll.u32 %s5, 4
      %s52 = int_to_ptr.hbm [resolvable:$true] %s51
      %s53 = sshll.u32 [#allocation7], 4
      %s54 = int_to_ptr.vmem [resolvable:$true] %s53
      %59 = dma.hbm_to_vmem [thread:$0]  %s52, 1024, %s54, [#allocation6], 64, 64, 4
    $region25: #{tpu_custom_call.1} parent=1 // pred_fallthru
      _
    // Predicated region
    $region26: #{tpu_custom_call.1} parent=1 // pred_check
      _
    $region27: #{tpu_custom_call.1} parent=1 // pred_check_branch
      %61 = sbr.rel (0) target = $region29
    $region28: #{tpu_custom_call.1} parent=1 // pred_region
      _
    $region29: #{tpu_custom_call.1} parent=1 // pred_fallthru
      _
    // Predicated region
    $region30: #{tpu_custom_call.1} parent=1 // pred_check
      _
    $region31: #{tpu_custom_call.1} parent=1 // pred_check_branch
      %63 = sbr.rel (0) target = $region33
    $region32: #{tpu_custom_call.1} parent=1 // pred_region
      %65 = dma.done [#allocation3], 7168
    $region33: #{tpu_custom_call.1} parent=1 // pred_fallthru
      _
    // Predicated region
    $region34: #{tpu_custom_call.1} parent=1 // pred_check
      _
    $region35: #{tpu_custom_call.1} parent=1 // pred_check_branch
      %67 = sbr.rel (0) target = $region37
    $region36: #{tpu_custom_call.1} parent=1 // pred_region
      %69 = dma.done [#allocation6], 7168
    $region37: #{tpu_custom_call.1} parent=1 // pred_fallthru
      _
    // Predicated region
    $region38: #{tpu_custom_call.1} parent=1 // pred_check
      _
    $region39: #{tpu_custom_call.1} parent=1 // pred_check_branch
      %71 = sbr.rel (0) target = $region41
    $region40: #{tpu_custom_call.1} parent=1 // pred_region
      %73 = dma.done [#allocation6], 1024
    $region41: #{tpu_custom_call.1} parent=1 // pred_fallthru
      _
    %v74 = vld [vmem:[#allocation2] sm:$0xff]
    %v75 = vld [vmem:[#allocation2 + $0x8] sm:$0xff]
    %v76 = vld [vmem:[#allocation2 + $0x10] sm:$0xff]
    %v77 = vld [vmem:[#allocation2 + $0x18] sm:$0xf]
    %v78 = vld [vmem:[#allocation2 + $0x1c] sm:$0xff]
    %v79 = vld [vmem:[#allocation2 + $0x24] sm:$0xff]
    %v80 = vld [vmem:[#allocation2 + $0x2c] sm:$0xff]
    %v81 = vld [vmem:[#allocation2 + $0x34] sm:$0xf]
    %v82 = vld [vmem:[#allocation2 + $0x38] sm:$0xff]
    %v83 = vld [vmem:[#allocation2 + $0x40] sm:$0xff]
    %v84 = vld [vmem:[#allocation2 + $0x48] sm:$0xff]
    %v85 = vld [vmem:[#allocation2 + $0x50] sm:$0xf]
    %v86 = vld [vmem:[#allocation2 + $0x54] sm:$0xff]
    %v87 = vld [vmem:[#allocation2 + $0x5c] sm:$0xff]
    %v88 = vld [vmem:[#allocation2 + $0x64] sm:$0xff]
    %v89 = vld [vmem:[#allocation2 + $0x6c] sm:$0xf]
    %v90 = vld [vmem:[#allocation2 + $0x70] sm:$0xff]
    %v91 = vld [vmem:[#allocation2 + $0x78] sm:$0xff]
    %v92 = vld [vmem:[#allocation2 + $0x80] sm:$0xff]
    %v93 = vld [vmem:[#allocation2 + $0x88] sm:$0xf]
    %v94 = vld [vmem:[#allocation2 + $0x8c] sm:$0xff]
    %v95 = vld [vmem:[#allocation2 + $0x94] sm:$0xff]
    %v96 = vld [vmem:[#allocation2 + $0x9c] sm:$0xff]
    %v97 = vld [vmem:[#allocation2 + $0xa4] sm:$0xf]
    %v98 = vld [vmem:[#allocation2 + $0xa8] sm:$0xff]
    %v99 = vld [vmem:[#allocation2 + $0xb0] sm:$0xff]
    %v100 = vld [vmem:[#allocation2 + $0xb8] sm:$0xff]
    %v101 = vld [vmem:[#allocation2 + $0xc0] sm:$0xf]
    %v102 = vld [vmem:[#allocation2 + $0xc4] sm:$0xff]
    %v103 = vld [vmem:[#allocation2 + $0xcc] sm:$0xff]
    %v104 = vld [vmem:[#allocation2 + $0xd4] sm:$0xff]
    %v105 = vld [vmem:[#allocation2 + $0xdc] sm:$0xf]
    %v106 = vld [vmem:[#allocation2 + $0xe0] sm:$0xff]
    %v107 = vld [vmem:[#allocation2 + $0xe8] sm:$0xff]
    %v108 = vld [vmem:[#allocation2 + $0xf0] sm:$0xff]
    %v109 = vld [vmem:[#allocation2 + $0xf8] sm:$0xf]
    %v110 = vld [vmem:[#allocation2 + $0xfc] sm:$0xff]
    %v111 = vld [vmem:[#allocation2 + $0x104] sm:$0xff]
    %v112 = vld [vmem:[#allocation2 + $0x10c] sm:$0xff]
    %v113 = vld [vmem:[#allocation2 + $0x114] sm:$0xf]
    %v114 = vld [vmem:[#allocation2 + $0x118] sm:$0xff]
    %v115 = vld [vmem:[#allocation2 + $0x120] sm:$0xff]
    %v116 = vld [vmem:[#allocation2 + $0x128] sm:$0xff]
    %v117 = vld [vmem:[#allocation2 + $0x130] sm:$0xf]
    %v118 = vld [vmem:[#allocation2 + $0x134] sm:$0xff]
    %v119 = vld [vmem:[#allocation2 + $0x13c] sm:$0xff]
    %v120 = vld [vmem:[#allocation2 + $0x144] sm:$0xff]
    %v121 = vld [vmem:[#allocation2 + $0x14c] sm:$0xf]
    %v122 = vld [vmem:[#allocation2 + $0x150] sm:$0xff]
    %v123 = vld [vmem:[#allocation2 + $0x158] sm:$0xff]
    %v124 = vld [vmem:[#allocation2 + $0x160] sm:$0xff]
    %v125 = vld [vmem:[#allocation2 + $0x168] sm:$0xf]
    %v126 = vld [vmem:[#allocation2 + $0x16c] sm:$0xff]
    %v127 = vld [vmem:[#allocation2 + $0x174] sm:$0xff]
    %v128 = vld [vmem:[#allocation2 + $0x17c] sm:$0xff]
    %v129 = vld [vmem:[#allocation2 + $0x184] sm:$0xf]
    %v130 = vld [vmem:[#allocation2 + $0x188] sm:$0xff]
    %v131 = vld [vmem:[#allocation2 + $0x190] sm:$0xff]
    %v132 = vld [vmem:[#allocation2 + $0x198] sm:$0xff]
    %v133 = vld [vmem:[#allocation2 + $0x1a0] sm:$0xf]
    %v134 = vld [vmem:[#allocation2 + $0x1a4] sm:$0xff]
    %v135 = vld [vmem:[#allocation2 + $0x1ac] sm:$0xff]
    %v136 = vld [vmem:[#allocation2 + $0x1b4] sm:$0xff]
    %v137 = vld [vmem:[#allocation2 + $0x1bc] sm:$0xf]
    %v138 = vld [vmem:[#allocation5] sm:$0xf]
    %v139 = vld [vmem:[#allocation5 + $0x4] sm:$0xf]
    %v140 = vld [vmem:[#allocation5 + $0x8] sm:$0xf]
    %v141 = vld [vmem:[#allocation5 + $0xc] sm:$0xf]
    %v142 = vld [vmem:[#allocation5 + $0x10] sm:$0xf]
    %v143 = vld [vmem:[#allocation5 + $0x14] sm:$0xf]
    %v144 = vld [vmem:[#allocation5 + $0x18] sm:$0xf]
    %v145 = vld [vmem:[#allocation5 + $0x1c] sm:$0xf]
    %v146 = vld [vmem:[#allocation5 + $0x20] sm:$0xf]
    %v147 = vld [vmem:[#allocation5 + $0x24] sm:$0xf]
    %v148 = vld [vmem:[#allocation5 + $0x28] sm:$0xf]
    %v149 = vld [vmem:[#allocation5 + $0x2c] sm:$0xf]
    %v150 = vld [vmem:[#allocation5 + $0x30] sm:$0xf]
    %v151 = vld [vmem:[#allocation5 + $0x34] sm:$0xf]
    %v152 = vld [vmem:[#allocation5 + $0x38] sm:$0xf]
    %v153 = vld [vmem:[#allocation5 + $0x3c] sm:$0xf]
    %v154 = vld [vmem:[#allocation5 + $0x40] sm:$0xf]
    %v155 = vld [vmem:[#allocation5 + $0x44] sm:$0xf]
    %v156 = vld [vmem:[#allocation5 + $0x48] sm:$0xf]
    %v157 = vld [vmem:[#allocation5 + $0x4c] sm:$0xf]
    %v158 = vld [vmem:[#allocation5 + $0x50] sm:$0xf]
    %v159 = vld [vmem:[#allocation5 + $0x54] sm:$0xf]
    %v160 = vld [vmem:[#allocation5 + $0x58] sm:$0xf]
    %v161 = vld [vmem:[#allocation5 + $0x5c] sm:$0xf]
    %v162 = vld [vmem:[#allocation5 + $0x60] sm:$0xf]
    %v163 = vld [vmem:[#allocation5 + $0x64] sm:$0xf]
    %v164 = vld [vmem:[#allocation5 + $0x68] sm:$0xf]
    %v165 = vld [vmem:[#allocation5 + $0x6c] sm:$0xf]
    %v166 = vld [vmem:[#allocation5 + $0x70] sm:$0xf]
    %v167 = vld [vmem:[#allocation5 + $0x74] sm:$0xf]
    %v168 = vld [vmem:[#allocation5 + $0x78] sm:$0xf]
    %v169 = vld [vmem:[#allocation5 + $0x7c] sm:$0xf]
    %v170 = vld [vmem:[#allocation5 + $0x80] sm:$0xf]
    %v171 = vld [vmem:[#allocation5 + $0x84] sm:$0xf]
    %v172 = vld [vmem:[#allocation5 + $0x88] sm:$0xf]
    %v173 = vld [vmem:[#allocation5 + $0x8c] sm:$0xf]
    %v174 = vld [vmem:[#allocation5 + $0x90] sm:$0xf]
    %v175 = vld [vmem:[#allocation5 + $0x94] sm:$0xf]
    %v176 = vld [vmem:[#allocation5 + $0x98] sm:$0xf]
    %v177 = vld [vmem:[#allocation5 + $0x9c] sm:$0xf]
    %v178 = vld [vmem:[#allocation5 + $0xa0] sm:$0xf]
    %v179 = vld [vmem:[#allocation5 + $0xa4] sm:$0xf]
    %v180 = vld [vmem:[#allocation5 + $0xa8] sm:$0xf]
    %v181 = vld [vmem:[#allocation5 + $0xac] sm:$0xf]
    %v182 = vld [vmem:[#allocation5 + $0xb0] sm:$0xf]
    %v183 = vld [vmem:[#allocation5 + $0xb4] sm:$0xf]
    %v184 = vld [vmem:[#allocation5 + $0xb8] sm:$0xf]
    %v185 = vld [vmem:[#allocation5 + $0xbc] sm:$0xf]
    %v186 = vld [vmem:[#allocation5 + $0xc0] sm:$0xf]
    %v187 = vld [vmem:[#allocation5 + $0xc4] sm:$0xf]
    %v188 = vld [vmem:[#allocation5 + $0xc8] sm:$0xf]
    %v189 = vld [vmem:[#allocation5 + $0xcc] sm:$0xf]
    %v190 = vld [vmem:[#allocation5 + $0xd0] sm:$0xf]
    %v191 = vld [vmem:[#allocation5 + $0xd4] sm:$0xf]
    %v192 = vld [vmem:[#allocation5 + $0xd8] sm:$0xf]
    %v193 = vld [vmem:[#allocation5 + $0xdc] sm:$0xf]
    %v194 = vld [vmem:[#allocation5 + $0xe0] sm:$0xf]
    %v195 = vld [vmem:[#allocation5 + $0xe4] sm:$0xf]
    %v196 = vld [vmem:[#allocation5 + $0xe8] sm:$0xf]
    %v197 = vld [vmem:[#allocation5 + $0xec] sm:$0xf]
    %v198 = vld [vmem:[#allocation5 + $0xf0] sm:$0xf]
    %v199 = vld [vmem:[#allocation5 + $0xf4] sm:$0xf]
    %v200 = vld [vmem:[#allocation5 + $0xf8] sm:$0xf]
    %v201 = vld [vmem:[#allocation5 + $0xfc] sm:$0xf]
    %v202 = vld [vmem:[#allocation5 + $0x100] sm:$0xf]
    %v203 = vld [vmem:[#allocation5 + $0x104] sm:$0xf]
    %v204 = vld [vmem:[#allocation5 + $0x108] sm:$0xf]
    %v205 = vld [vmem:[#allocation5 + $0x10c] sm:$0xf]
    %v206 = vld [vmem:[#allocation5 + $0x110] sm:$0xf]
    %v207 = vld [vmem:[#allocation5 + $0x114] sm:$0xf]
    %v208 = vld [vmem:[#allocation5 + $0x118] sm:$0xf]
    %v209 = vld [vmem:[#allocation5 + $0x11c] sm:$0xf]
    %v210 = vld [vmem:[#allocation5 + $0x120] sm:$0xf]
    %v211 = vld [vmem:[#allocation5 + $0x124] sm:$0xf]
    %v212 = vld [vmem:[#allocation5 + $0x128] sm:$0xf]
    %v213 = vld [vmem:[#allocation5 + $0x12c] sm:$0xf]
    %v214 = vld [vmem:[#allocation5 + $0x130] sm:$0xf]
    %v215 = vld [vmem:[#allocation5 + $0x134] sm:$0xf]
    %v216 = vld [vmem:[#allocation5 + $0x138] sm:$0xf]
    %v217 = vld [vmem:[#allocation5 + $0x13c] sm:$0xf]
    %v218 = vld [vmem:[#allocation5 + $0x140] sm:$0xf]
    %v219 = vld [vmem:[#allocation5 + $0x144] sm:$0xf]
    %v220 = vld [vmem:[#allocation5 + $0x148] sm:$0xf]
    %v221 = vld [vmem:[#allocation5 + $0x14c] sm:$0xf]
    %v222 = vld [vmem:[#allocation5 + $0x150] sm:$0xf]
    %v223 = vld [vmem:[#allocation5 + $0x154] sm:$0xf]
    %v224 = vld [vmem:[#allocation5 + $0x158] sm:$0xf]
    %v225 = vld [vmem:[#allocation5 + $0x15c] sm:$0xf]
    %v226 = vld [vmem:[#allocation5 + $0x160] sm:$0xf]
    %v227 = vld [vmem:[#allocation5 + $0x164] sm:$0xf]
    %v228 = vld [vmem:[#allocation5 + $0x168] sm:$0xf]
    %v229 = vld [vmem:[#allocation5 + $0x16c] sm:$0xf]
    %v230 = vld [vmem:[#allocation5 + $0x170] sm:$0xf]
    %v231 = vld [vmem:[#allocation5 + $0x174] sm:$0xf]
    %v232 = vld [vmem:[#allocation5 + $0x178] sm:$0xf]
    %v233 = vld [vmem:[#allocation5 + $0x17c] sm:$0xf]
    %v234 = vld [vmem:[#allocation5 + $0x180] sm:$0xf]
    %v235 = vld [vmem:[#allocation5 + $0x184] sm:$0xf]
    %v236 = vld [vmem:[#allocation5 + $0x188] sm:$0xf]
    %v237 = vld [vmem:[#allocation5 + $0x18c] sm:$0xf]
    %v238 = vld [vmem:[#allocation5 + $0x190] sm:$0xf]
    %v239 = vld [vmem:[#allocation5 + $0x194] sm:$0xf]
    %v240 = vld [vmem:[#allocation5 + $0x198] sm:$0xf]
    %v241 = vld [vmem:[#allocation5 + $0x19c] sm:$0xf]
    %v242 = vld [vmem:[#allocation5 + $0x1a0] sm:$0xf]
    %v243 = vld [vmem:[#allocation5 + $0x1a4] sm:$0xf]
    %v244 = vld [vmem:[#allocation5 + $0x1a8] sm:$0xf]
    %v245 = vld [vmem:[#allocation5 + $0x1ac] sm:$0xf]
    %v246 = vld [vmem:[#allocation5 + $0x1b0] sm:$0xf]
    %v247 = vld [vmem:[#allocation5 + $0x1b4] sm:$0xf]
    %v248 = vld [vmem:[#allocation5 + $0x1b8] sm:$0xf]
    %v249 = vld [vmem:[#allocation5 + $0x1bc] sm:$0xf]
    %v250 = vld [vmem:[%s2] sm:$0x1]
    %v252 = vperm.slane %v250, 0
    %v318 = vunpack.c.l.b16 %v74
    %v319 = vunpack.c.h.b16 %v74
    %v320 = vunpack.c.l.b16 %v75
    %v321 = vunpack.c.h.b16 %v75
    %v322 = vunpack.c.l.b16 %v76
    %v323 = vunpack.c.h.b16 %v76
    %v324 = vunpack.c.l.b16 %v77
    %v325 = vunpack.c.l.b16 %v78
    %v326 = vunpack.c.h.b16 %v78
    %v327 = vunpack.c.l.b16 %v79
    %v328 = vunpack.c.h.b16 %v79
    %v329 = vunpack.c.l.b16 %v80
    %v330 = vunpack.c.h.b16 %v80
    %v331 = vunpack.c.l.b16 %v81
    %v332 = vunpack.c.l.b16 %v82
    %v333 = vunpack.c.h.b16 %v82
    %v334 = vunpack.c.l.b16 %v83
    %v335 = vunpack.c.h.b16 %v83
    %v336 = vunpack.c.l.b16 %v84
    %v337 = vunpack.c.h.b16 %v84
    %v338 = vunpack.c.l.b16 %v85
    %v339 = vunpack.c.l.b16 %v86
    %v340 = vunpack.c.h.b16 %v86
    %v341 = vunpack.c.l.b16 %v87
    %v342 = vunpack.c.h.b16 %v87
    %v343 = vunpack.c.l.b16 %v88
    %v344 = vunpack.c.h.b16 %v88
    %v345 = vunpack.c.l.b16 %v89
    %v346 = vunpack.c.l.b16 %v90
    %v347 = vunpack.c.h.b16 %v90
    %v348 = vunpack.c.l.b16 %v91
    %v349 = vunpack.c.h.b16 %v91
    %v350 = vunpack.c.l.b16 %v92
    %v351 = vunpack.c.h.b16 %v92
    %v352 = vunpack.c.l.b16 %v93
    %v353 = vunpack.c.l.b16 %v94
    %v354 = vunpack.c.h.b16 %v94
    %v355 = vunpack.c.l.b16 %v95
    %v356 = vunpack.c.h.b16 %v95
    %v357 = vunpack.c.l.b16 %v96
    %v358 = vunpack.c.h.b16 %v96
    %v359 = vunpack.c.l.b16 %v97
    %v360 = vunpack.c.l.b16 %v98
    %v361 = vunpack.c.h.b16 %v98
    %v362 = vunpack.c.l.b16 %v99
    %v363 = vunpack.c.h.b16 %v99
    %v364 = vunpack.c.l.b16 %v100
    %v365 = vunpack.c.h.b16 %v100
    %v366 = vunpack.c.l.b16 %v101
    %v367 = vunpack.c.l.b16 %v102
    %v368 = vunpack.c.h.b16 %v102
    %v369 = vunpack.c.l.b16 %v103
    %v370 = vunpack.c.h.b16 %v103
    %v371 = vunpack.c.l.b16 %v104
    %v372 = vunpack.c.h.b16 %v104
    %v373 = vunpack.c.l.b16 %v105
    %v374 = vunpack.c.l.b16 %v106
    %v375 = vunpack.c.h.b16 %v106
    %v376 = vunpack.c.l.b16 %v107
    %v377 = vunpack.c.h.b16 %v107
    %v378 = vunpack.c.l.b16 %v108
    %v379 = vunpack.c.h.b16 %v108
    %v380 = vunpack.c.l.b16 %v109
    %v381 = vunpack.c.l.b16 %v110
    %v382 = vunpack.c.h.b16 %v110
    %v383 = vunpack.c.l.b16 %v111
    %v384 = vunpack.c.h.b16 %v111
    %v385 = vunpack.c.l.b16 %v112
    %v386 = vunpack.c.h.b16 %v112
    %v387 = vunpack.c.l.b16 %v113
    %v388 = vunpack.c.l.b16 %v114
    %v389 = vunpack.c.h.b16 %v114
    %v390 = vunpack.c.l.b16 %v115
    %v391 = vunpack.c.h.b16 %v115
    %v392 = vunpack.c.l.b16 %v116
    %v393 = vunpack.c.h.b16 %v116
    %v394 = vunpack.c.l.b16 %v117
    %v395 = vunpack.c.l.b16 %v118
    %v396 = vunpack.c.h.b16 %v118
    %v397 = vunpack.c.l.b16 %v119
    %v398 = vunpack.c.h.b16 %v119
    %v399 = vunpack.c.l.b16 %v120
    %v400 = vunpack.c.h.b16 %v120
    %v401 = vunpack.c.l.b16 %v121
    %v402 = vunpack.c.l.b16 %v122
    %v403 = vunpack.c.h.b16 %v122
    %v404 = vunpack.c.l.b16 %v123
    %v405 = vunpack.c.h.b16 %v123
    %v406 = vunpack.c.l.b16 %v124
    %v407 = vunpack.c.h.b16 %v124
    %v408 = vunpack.c.l.b16 %v125
    %v409 = vunpack.c.l.b16 %v126
    %v410 = vunpack.c.h.b16 %v126
    %v411 = vunpack.c.l.b16 %v127
    %v412 = vunpack.c.h.b16 %v127
    %v413 = vunpack.c.l.b16 %v128
    %v414 = vunpack.c.h.b16 %v128
    %v415 = vunpack.c.l.b16 %v129
    %v416 = vunpack.c.l.b16 %v130
    %v417 = vunpack.c.h.b16 %v130
    %v418 = vunpack.c.l.b16 %v131
    %v419 = vunpack.c.h.b16 %v131
    %v420 = vunpack.c.l.b16 %v132
    %v421 = vunpack.c.h.b16 %v132
    %v422 = vunpack.c.l.b16 %v133
    %v423 = vunpack.c.l.b16 %v134
    %v424 = vunpack.c.h.b16 %v134
    %v425 = vunpack.c.l.b16 %v135
    %v426 = vunpack.c.h.b16 %v135
    %v427 = vunpack.c.l.b16 %v136
    %v428 = vunpack.c.h.b16 %v136
    %v429 = vunpack.c.l.b16 %v137
    %v430 = vpack.c.b16 %v325, %v318
    %v431 = vpack.c.b16 %v326, %v319
    %v432 = vpack.c.b16 %v327, %v320
    %v433 = vpack.c.b16 %v328, %v321
    %v434 = vpack.c.b16 %v329, %v322
    %v435 = vpack.c.b16 %v330, %v323
    %v436 = vpack.c.b16 %v331, %v324
    %v437 = vpack.c.b16 %v339, %v332
    %v438 = vpack.c.b16 %v340, %v333
    %v439 = vpack.c.b16 %v341, %v334
    %v440 = vpack.c.b16 %v342, %v335
    %v441 = vpack.c.b16 %v343, %v336
    %v442 = vpack.c.b16 %v344, %v337
    %v443 = vpack.c.b16 %v345, %v338
    %v444 = vpack.c.b16 %v353, %v346
    %v445 = vpack.c.b16 %v354, %v347
    %v446 = vpack.c.b16 %v355, %v348
    %v447 = vpack.c.b16 %v356, %v349
    %v448 = vpack.c.b16 %v357, %v350
    %v449 = vpack.c.b16 %v358, %v351
    %v450 = vpack.c.b16 %v359, %v352
    %v451 = vpack.c.b16 %v367, %v360
    %v452 = vpack.c.b16 %v368, %v361
    %v453 = vpack.c.b16 %v369, %v362
    %v454 = vpack.c.b16 %v370, %v363
    %v455 = vpack.c.b16 %v371, %v364
    %v456 = vpack.c.b16 %v372, %v365
    %v457 = vpack.c.b16 %v373, %v366
    %v458 = vpack.c.b16 %v381, %v374
    %v459 = vpack.c.b16 %v382, %v375
    %v460 = vpack.c.b16 %v383, %v376
    %v461 = vpack.c.b16 %v384, %v377
    %v462 = vpack.c.b16 %v385, %v378
    %v463 = vpack.c.b16 %v386, %v379
    %v464 = vpack.c.b16 %v387, %v380
    %v465 = vpack.c.b16 %v395, %v388
    %v466 = vpack.c.b16 %v396, %v389
    %v467 = vpack.c.b16 %v397, %v390
    %v468 = vpack.c.b16 %v398, %v391
    %v469 = vpack.c.b16 %v399, %v392
    %v470 = vpack.c.b16 %v400, %v393
    %v471 = vpack.c.b16 %v401, %v394
    %v472 = vpack.c.b16 %v409, %v402
    %v473 = vpack.c.b16 %v410, %v403
    %v474 = vpack.c.b16 %v411, %v404
    %v475 = vpack.c.b16 %v412, %v405
    %v476 = vpack.c.b16 %v413, %v406
    %v477 = vpack.c.b16 %v414, %v407
    %v478 = vpack.c.b16 %v415, %v408
    %v479 = vpack.c.b16 %v423, %v416
    %v480 = vpack.c.b16 %v424, %v417
    %v481 = vpack.c.b16 %v425, %v418
    %v482 = vpack.c.b16 %v426, %v419
    %v483 = vpack.c.b16 %v427, %v420
    %v484 = vpack.c.b16 %v428, %v421
    %v485 = vpack.c.b16 %v429, %v422
    %v654 = vunpack.c.l.b16 %v138
    %v655 = vunpack.c.l.b16 %v139
    %v656 = vunpack.c.l.b16 %v140
    %v657 = vunpack.c.l.b16 %v141
    %v658 = vunpack.c.l.b16 %v142
    %v659 = vunpack.c.l.b16 %v143
    %v660 = vunpack.c.l.b16 %v144
    %v661 = vunpack.c.l.b16 %v145
    %v662 = vunpack.c.l.b16 %v146
    %v663 = vunpack.c.l.b16 %v147
    %v664 = vunpack.c.l.b16 %v148
    %v665 = vunpack.c.l.b16 %v149
    %v666 = vunpack.c.l.b16 %v150
    %v667 = vunpack.c.l.b16 %v151
    %v668 = vunpack.c.l.b16 %v152
    %v669 = vunpack.c.l.b16 %v153
    %v670 = vunpack.c.l.b16 %v154
    %v671 = vunpack.c.l.b16 %v155
    %v672 = vunpack.c.l.b16 %v156
    %v673 = vunpack.c.l.b16 %v157
    %v674 = vunpack.c.l.b16 %v158
    %v675 = vunpack.c.l.b16 %v159
    %v676 = vunpack.c.l.b16 %v160
    %v677 = vunpack.c.l.b16 %v161
    %v678 = vunpack.c.l.b16 %v162
    %v679 = vunpack.c.l.b16 %v163
    %v680 = vunpack.c.l.b16 %v164
    %v681 = vunpack.c.l.b16 %v165
    %v682 = vunpack.c.l.b16 %v166
    %v683 = vunpack.c.l.b16 %v167
    %v684 = vunpack.c.l.b16 %v168
    %v685 = vunpack.c.l.b16 %v169
    %v686 = vunpack.c.l.b16 %v170
    %v687 = vunpack.c.l.b16 %v171
    %v688 = vunpack.c.l.b16 %v172
    %v689 = vunpack.c.l.b16 %v173
    %v690 = vunpack.c.l.b16 %v174
    %v691 = vunpack.c.l.b16 %v175
    %v692 = vunpack.c.l.b16 %v176
    %v693 = vunpack.c.l.b16 %v177
    %v694 = vunpack.c.l.b16 %v178
    %v695 = vunpack.c.l.b16 %v179
    %v696 = vunpack.c.l.b16 %v180
    %v697 = vunpack.c.l.b16 %v181
    %v698 = vunpack.c.l.b16 %v182
    %v699 = vunpack.c.l.b16 %v183
    %v700 = vunpack.c.l.b16 %v184
    %v701 = vunpack.c.l.b16 %v185
    %v702 = vunpack.c.l.b16 %v186
    %v703 = vunpack.c.l.b16 %v187
    %v704 = vunpack.c.l.b16 %v188
    %v705 = vunpack.c.l.b16 %v189
    %v706 = vunpack.c.l.b16 %v190
    %v707 = vunpack.c.l.b16 %v191
    %v708 = vunpack.c.l.b16 %v192
    %v709 = vunpack.c.l.b16 %v193
    %v710 = vunpack.c.l.b16 %v194
    %v711 = vunpack.c.l.b16 %v195
    %v712 = vunpack.c.l.b16 %v196
    %v713 = vunpack.c.l.b16 %v197
    %v714 = vunpack.c.l.b16 %v198
    %v715 = vunpack.c.l.b16 %v199
    %v716 = vunpack.c.l.b16 %v200
    %v717 = vunpack.c.l.b16 %v201
    %v718 = vunpack.c.l.b16 %v202
    %v719 = vunpack.c.l.b16 %v203
    %v720 = vunpack.c.l.b16 %v204
    %v721 = vunpack.c.l.b16 %v205
    %v722 = vunpack.c.l.b16 %v206
    %v723 = vunpack.c.l.b16 %v207
    %v724 = vunpack.c.l.b16 %v208
    %v725 = vunpack.c.l.b16 %v209
    %v726 = vunpack.c.l.b16 %v210
    %v727 = vunpack.c.l.b16 %v211
    %v728 = vunpack.c.l.b16 %v212
    %v729 = vunpack.c.l.b16 %v213
    %v730 = vunpack.c.l.b16 %v214
    %v731 = vunpack.c.l.b16 %v215
    %v732 = vunpack.c.l.b16 %v216
    %v733 = vunpack.c.l.b16 %v217
    %v734 = vunpack.c.l.b16 %v218
    %v735 = vunpack.c.l.b16 %v219
    %v736 = vunpack.c.l.b16 %v220
    %v737 = vunpack.c.l.b16 %v221
    %v738 = vunpack.c.l.b16 %v222
    %v739 = vunpack.c.l.b16 %v223
    %v740 = vunpack.c.l.b16 %v224
    %v741 = vunpack.c.l.b16 %v225
    %v742 = vunpack.c.l.b16 %v226
    %v743 = vunpack.c.l.b16 %v227
    %v744 = vunpack.c.l.b16 %v228
    %v745 = vunpack.c.l.b16 %v229
    %v746 = vunpack.c.l.b16 %v230
    %v747 = vunpack.c.l.b16 %v231
    %v748 = vunpack.c.l.b16 %v232
    %v749 = vunpack.c.l.b16 %v233
    %v750 = vunpack.c.l.b16 %v234
    %v751 = vunpack.c.l.b16 %v235
    %v752 = vunpack.c.l.b16 %v236
    %v753 = vunpack.c.l.b16 %v237
    %v754 = vunpack.c.l.b16 %v238
    %v755 = vunpack.c.l.b16 %v239
    %v756 = vunpack.c.l.b16 %v240
    %v757 = vunpack.c.l.b16 %v241
    %v758 = vunpack.c.l.b16 %v242
    %v759 = vunpack.c.l.b16 %v243
    %v760 = vunpack.c.l.b16 %v244
    %v761 = vunpack.c.l.b16 %v245
    %v762 = vunpack.c.l.b16 %v246
    %v763 = vunpack.c.l.b16 %v247
    %v764 = vunpack.c.l.b16 %v248
    %v765 = vunpack.c.l.b16 %v249
    %v766 = vpack.c.b16 %v655, %v654
    %v767 = vpack.c.b16 %v657, %v656
    %v768 = vpack.c.b16 %v659, %v658
    %v769 = vpack.c.b16 %v661, %v660
    %v770 = vpack.c.b16 %v663, %v662
    %v771 = vpack.c.b16 %v665, %v664
    %v772 = vpack.c.b16 %v667, %v666
    %v773 = vpack.c.b16 %v669, %v668
    %v774 = vpack.c.b16 %v671, %v670
    %v775 = vpack.c.b16 %v673, %v672
    %v776 = vpack.c.b16 %v675, %v674
    %v777 = vpack.c.b16 %v677, %v676
    %v778 = vpack.c.b16 %v679, %v678
    %v779 = vpack.c.b16 %v681, %v680
    %v780 = vpack.c.b16 %v683, %v682
    %v781 = vpack.c.b16 %v685, %v684
    %v782 = vpack.c.b16 %v687, %v686
    %v783 = vpack.c.b16 %v689, %v688
    %v784 = vpack.c.b16 %v691, %v690
    %v785 = vpack.c.b16 %v693, %v692
    %v786 = vpack.c.b16 %v695, %v694
    %v787 = vpack.c.b16 %v697, %v696
    %v788 = vpack.c.b16 %v699, %v698
    %v789 = vpack.c.b16 %v701, %v700
    %v790 = vpack.c.b16 %v703, %v702
    %v791 = vpack.c.b16 %v705, %v704
    %v792 = vpack.c.b16 %v707, %v706
    %v793 = vpack.c.b16 %v709, %v708
    %v794 = vpack.c.b16 %v711, %v710
    %v795 = vpack.c.b16 %v713, %v712
    %v796 = vpack.c.b16 %v715, %v714
    %v797 = vpack.c.b16 %v717, %v716
    %v798 = vpack.c.b16 %v719, %v718
    %v799 = vpack.c.b16 %v721, %v720
    %v800 = vpack.c.b16 %v723, %v722
    %v801 = vpack.c.b16 %v725, %v724
    %v802 = vpack.c.b16 %v727, %v726
    %v803 = vpack.c.b16 %v729, %v728
    %v804 = vpack.c.b16 %v731, %v730
    %v805 = vpack.c.b16 %v733, %v732
    %v806 = vpack.c.b16 %v735, %v734
    %v807 = vpack.c.b16 %v737, %v736
    %v808 = vpack.c.b16 %v739, %v738
    %v809 = vpack.c.b16 %v741, %v740
    %v810 = vpack.c.b16 %v743, %v742
    %v811 = vpack.c.b16 %v745, %v744
    %v812 = vpack.c.b16 %v747, %v746
    %v813 = vpack.c.b16 %v749, %v748
    %v814 = vpack.c.b16 %v751, %v750
    %v815 = vpack.c.b16 %v753, %v752
    %v816 = vpack.c.b16 %v755, %v754
    %v817 = vpack.c.b16 %v757, %v756
    %v818 = vpack.c.b16 %v759, %v758
    %v819 = vpack.c.b16 %v761, %v760
    %v820 = vpack.c.b16 %v763, %v762
    %v821 = vpack.c.b16 %v765, %v764
    %878 = vmatpush.bf16.msra.mxu0 %v773
    %879 = vmatpush.bf16.msra.mxu0 %v772
    %880 = vmatpush.bf16.msra.mxu0 %v771
    %881 = vmatpush.bf16.msra.mxu0 %v770
    %882 = vmatpush.bf16.msra.mxu0 %v769
    %883 = vmatpush.bf16.msra.mxu0 %v768
    %884 = vmatpush.bf16.msra.mxu0 %v767
    %885 = vmatpush.bf16.msra.mxu0 %v766
    %886 = vmatmul.bf16.gmra.mxu0 %v430
    %v887 = vpop.f32.mrf.mxu0
    %v888 = vadd.f32 %v252, %v887
    %v889 = vpop.f32.mrf.mxu0
    %v890 = vadd.f32 %v252, %v889
    %891 = vmatmul.bf16.gmra.mxu0 %v437
    %v892 = vpop.f32.mrf.mxu0
    %v893 = vadd.f32 %v252, %v892
    %v894 = vpop.f32.mrf.mxu0
    %v895 = vadd.f32 %v252, %v894
    %896 = vmatmul.bf16.gmra.mxu0 %v444
    %v897 = vpop.f32.mrf.mxu0
    %v898 = vadd.f32 %v252, %v897
    %v899 = vpop.f32.mrf.mxu0
    %v900 = vadd.f32 %v252, %v899
    %901 = vmatmul.bf16.gmra.mxu0 %v451
    %v902 = vpop.f32.mrf.mxu0
    %v903 = vadd.f32 %v252, %v902
    %v904 = vpop.f32.mrf.mxu0
    %v905 = vadd.f32 %v252, %v904
    %906 = vmatmul.bf16.gmra.mxu0 %v458
    %v907 = vpop.f32.mrf.mxu0
    %v908 = vadd.f32 %v252, %v907
    %v909 = vpop.f32.mrf.mxu0
    %v910 = vadd.f32 %v252, %v909
    %911 = vmatmul.bf16.gmra.mxu0 %v465
    %v912 = vpop.f32.mrf.mxu0
    %v913 = vadd.f32 %v252, %v912
    %v914 = vpop.f32.mrf.mxu0
    %v915 = vadd.f32 %v252, %v914
    %916 = vmatmul.bf16.gmra.mxu0 %v472
    %v917 = vpop.f32.mrf.mxu0
    %v918 = vadd.f32 %v252, %v917
    %v919 = vpop.f32.mrf.mxu0
    %v920 = vadd.f32 %v252, %v919
    %921 = vmatmul.bf16.gmra.mxu0 %v479
    %v922 = vpop.f32.mrf.mxu0
    %v923 = vadd.f32 %v252, %v922
    %v924 = vpop.f32.mrf.mxu0
    %v925 = vadd.f32 %v252, %v924
    %926 = vdwg.mxu0
    %927 = vmatpush.bf16.msra.mxu0 %v781
    %928 = vmatpush.bf16.msra.mxu0 %v780
    %929 = vmatpush.bf16.msra.mxu0 %v779
    %930 = vmatpush.bf16.msra.mxu0 %v778
    %931 = vmatpush.bf16.msra.mxu0 %v777
    %932 = vmatpush.bf16.msra.mxu0 %v776
    %933 = vmatpush.bf16.msra.mxu0 %v775
    %934 = vmatpush.bf16.msra.mxu0 %v774
    %935 = vmatmul.bf16.gmra.mxu0 %v431
    %v936 = vpop.f32.mrf.mxu0
    %v937 = vadd.f32 %v888, %v936
    %v938 = vpop.f32.mrf.mxu0
    %v939 = vadd.f32 %v890, %v938
    %940 = vmatmul.bf16.gmra.mxu0 %v438
    %v941 = vpop.f32.mrf.mxu0
    %v942 = vadd.f32 %v893, %v941
    %v943 = vpop.f32.mrf.mxu0
    %v944 = vadd.f32 %v895, %v943
    %945 = vmatmul.bf16.gmra.mxu0 %v445
    %v946 = vpop.f32.mrf.mxu0
    %v947 = vadd.f32 %v898, %v946
    %v948 = vpop.f32.mrf.mxu0
    %v949 = vadd.f32 %v900, %v948
    %950 = vmatmul.bf16.gmra.mxu0 %v452
    %v951 = vpop.f32.mrf.mxu0
    %v952 = vadd.f32 %v903, %v951
    %v953 = vpop.f32.mrf.mxu0
    %v954 = vadd.f32 %v905, %v953
    %955 = vmatmul.bf16.gmra.mxu0 %v459
    %v956 = vpop.f32.mrf.mxu0
    %v957 = vadd.f32 %v908, %v956
    %v958 = vpop.f32.mrf.mxu0
    %v959 = vadd.f32 %v910, %v958
    %960 = vmatmul.bf16.gmra.mxu0 %v466
    %v961 = vpop.f32.mrf.mxu0
    %v962 = vadd.f32 %v913, %v961
    %v963 = vpop.f32.mrf.mxu0
    %v964 = vadd.f32 %v915, %v963
    %965 = vmatmul.bf16.gmra.mxu0 %v473
    %v966 = vpop.f32.mrf.mxu0
    %v967 = vadd.f32 %v918, %v966
    %v968 = vpop.f32.mrf.mxu0
    %v969 = vadd.f32 %v920, %v968
    %970 = vmatmul.bf16.gmra.mxu0 %v480
    %v971 = vpop.f32.mrf.mxu0
    %v972 = vadd.f32 %v923, %v971
    %v973 = vpop.f32.mrf.mxu0
    %v974 = vadd.f32 %v925, %v973
    %975 = vdwg.mxu0
    %976 = vmatpush.bf16.msra.mxu0 %v789
    %977 = vmatpush.bf16.msra.mxu0 %v788
    %978 = vmatpush.bf16.msra.mxu0 %v787
    %979 = vmatpush.bf16.msra.mxu0 %v786
    %980 = vmatpush.bf16.msra.mxu0 %v785
    %981 = vmatpush.bf16.msra.mxu0 %v784
    %982 = vmatpush.bf16.msra.mxu0 %v783
    %983 = vmatpush.bf16.msra.mxu0 %v782
    %984 = vmatmul.bf16.gmra.mxu0 %v432
    %v985 = vpop.f32.mrf.mxu0
    %v986 = vadd.f32 %v937, %v985
    %v987 = vpop.f32.mrf.mxu0
    %v988 = vadd.f32 %v939, %v987
    %989 = vmatmul.bf16.gmra.mxu0 %v439
    %v990 = vpop.f32.mrf.mxu0
    %v991 = vadd.f32 %v942, %v990
    %v992 = vpop.f32.mrf.mxu0
    %v993 = vadd.f32 %v944, %v992
    %994 = vmatmul.bf16.gmra.mxu0 %v446
    %v995 = vpop.f32.mrf.mxu0
    %v996 = vadd.f32 %v947, %v995
    %v997 = vpop.f32.mrf.mxu0
    %v998 = vadd.f32 %v949, %v997
    %999 = vmatmul.bf16.gmra.mxu0 %v453
    %v1000 = vpop.f32.mrf.mxu0
    %v1001 = vadd.f32 %v952, %v1000
    %v1002 = vpop.f32.mrf.mxu0
    %v1003 = vadd.f32 %v954, %v1002
    %1004 = vmatmul.bf16.gmra.mxu0 %v460
    %v1005 = vpop.f32.mrf.mxu0
    %v1006 = vadd.f32 %v957, %v1005
    %v1007 = vpop.f32.mrf.mxu0
    %v1008 = vadd.f32 %v959, %v1007
    %1009 = vmatmul.bf16.gmra.mxu0 %v467
    %v1010 = vpop.f32.mrf.mxu0
    %v1011 = vadd.f32 %v962, %v1010
    %v1012 = vpop.f32.mrf.mxu0
    %v1013 = vadd.f32 %v964, %v1012
    %1014 = vmatmul.bf16.gmra.mxu0 %v474
    %v1015 = vpop.f32.mrf.mxu0
    %v1016 = vadd.f32 %v967, %v1015
    %v1017 = vpop.f32.mrf.mxu0
    %v1018 = vadd.f32 %v969, %v1017
    %1019 = vmatmul.bf16.gmra.mxu0 %v481
    %v1020 = vpop.f32.mrf.mxu0
    %v1021 = vadd.f32 %v972, %v1020
    %v1022 = vpop.f32.mrf.mxu0
    %v1023 = vadd.f32 %v974, %v1022
    %1024 = vdwg.mxu0
    %1025 = vmatpush.bf16.msra.mxu0 %v797
    %1026 = vmatpush.bf16.msra.mxu0 %v796
    %1027 = vmatpush.bf16.msra.mxu0 %v795
    %1028 = vmatpush.bf16.msra.mxu0 %v794
    %1029 = vmatpush.bf16.msra.mxu0 %v793
    %1030 = vmatpush.bf16.msra.mxu0 %v792
    %1031 = vmatpush.bf16.msra.mxu0 %v791
    %1032 = vmatpush.bf16.msra.mxu0 %v790
    %1033 = vmatmul.bf16.gmra.mxu0 %v433
    %v1034 = vpop.f32.mrf.mxu0
    %v1035 = vadd.f32 %v986, %v1034
    %v1036 = vpop.f32.mrf.mxu0
    %v1037 = vadd.f32 %v988, %v1036
    %1038 = vmatmul.bf16.gmra.mxu0 %v440
    %v1039 = vpop.f32.mrf.mxu0
    %v1040 = vadd.f32 %v991, %v1039
    %v1041 = vpop.f32.mrf.mxu0
    %v1042 = vadd.f32 %v993, %v1041
    %1043 = vmatmul.bf16.gmra.mxu0 %v447
    %v1044 = vpop.f32.mrf.mxu0
    %v1045 = vadd.f32 %v996, %v1044
    %v1046 = vpop.f32.mrf.mxu0
    %v1047 = vadd.f32 %v998, %v1046
    %1048 = vmatmul.bf16.gmra.mxu0 %v454
    %v1049 = vpop.f32.mrf.mxu0
    %v1050 = vadd.f32 %v1001, %v1049
    %v1051 = vpop.f32.mrf.mxu0
    %v1052 = vadd.f32 %v1003, %v1051
    %1053 = vmatmul.bf16.gmra.mxu0 %v461
    %v1054 = vpop.f32.mrf.mxu0
    %v1055 = vadd.f32 %v1006, %v1054
    %v1056 = vpop.f32.mrf.mxu0
    %v1057 = vadd.f32 %v1008, %v1056
    %1058 = vmatmul.bf16.gmra.mxu0 %v468
    %v1059 = vpop.f32.mrf.mxu0
    %v1060 = vadd.f32 %v1011, %v1059
    %v1061 = vpop.f32.mrf.mxu0
    %v1062 = vadd.f32 %v1013, %v1061
    %1063 = vmatmul.bf16.gmra.mxu0 %v475
    %v1064 = vpop.f32.mrf.mxu0
    %v1065 = vadd.f32 %v1016, %v1064
    %v1066 = vpop.f32.mrf.mxu0
    %v1067 = vadd.f32 %v1018, %v1066
    %1068 = vmatmul.bf16.gmra.mxu0 %v482
    %v1069 = vpop.f32.mrf.mxu0
    %v1070 = vadd.f32 %v1021, %v1069
    %v1071 = vpop.f32.mrf.mxu0
    %v1072 = vadd.f32 %v1023, %v1071
    %1073 = vdwg.mxu0
    %1074 = vmatpush.bf16.msra.mxu0 %v805
    %1075 = vmatpush.bf16.msra.mxu0 %v804
    %1076 = vmatpush.bf16.msra.mxu0 %v803
    %1077 = vmatpush.bf16.msra.mxu0 %v802
    %1078 = vmatpush.bf16.msra.mxu0 %v801
    %1079 = vmatpush.bf16.msra.mxu0 %v800
    %1080 = vmatpush.bf16.msra.mxu0 %v799
    %1081 = vmatpush.bf16.msra.mxu0 %v798
    %1082 = vmatmul.bf16.gmra.mxu0 %v434
    %v1083 = vpop.f32.mrf.mxu0
    %v1084 = vadd.f32 %v1035, %v1083
    %v1085 = vpop.f32.mrf.mxu0
    %v1086 = vadd.f32 %v1037, %v1085
    %1087 = vmatmul.bf16.gmra.mxu0 %v441
    %v1088 = vpop.f32.mrf.mxu0
    %v1089 = vadd.f32 %v1040, %v1088
    %v1090 = vpop.f32.mrf.mxu0
    %v1091 = vadd.f32 %v1042, %v1090
    %1092 = vmatmul.bf16.gmra.mxu0 %v448
    %v1093 = vpop.f32.mrf.mxu0
    %v1094 = vadd.f32 %v1045, %v1093
    %v1095 = vpop.f32.mrf.mxu0
    %v1096 = vadd.f32 %v1047, %v1095
    %1097 = vmatmul.bf16.gmra.mxu0 %v455
    %v1098 = vpop.f32.mrf.mxu0
    %v1099 = vadd.f32 %v1050, %v1098
    %v1100 = vpop.f32.mrf.mxu0
    %v1101 = vadd.f32 %v1052, %v1100
    %1102 = vmatmul.bf16.gmra.mxu0 %v462
    %v1103 = vpop.f32.mrf.mxu0
    %v1104 = vadd.f32 %v1055, %v1103
    %v1105 = vpop.f32.mrf.mxu0
    %v1106 = vadd.f32 %v1057, %v1105
    %1107 = vmatmul.bf16.gmra.mxu0 %v469
    %v1108 = vpop.f32.mrf.mxu0
    %v1109 = vadd.f32 %v1060, %v1108
    %v1110 = vpop.f32.mrf.mxu0
    %v1111 = vadd.f32 %v1062, %v1110
    %1112 = vmatmul.bf16.gmra.mxu0 %v476
    %v1113 = vpop.f32.mrf.mxu0
    %v1114 = vadd.f32 %v1065, %v1113
    %v1115 = vpop.f32.mrf.mxu0
    %v1116 = vadd.f32 %v1067, %v1115
    %1117 = vmatmul.bf16.gmra.mxu0 %v483
    %v1118 = vpop.f32.mrf.mxu0
    %v1119 = vadd.f32 %v1070, %v1118
    %v1120 = vpop.f32.mrf.mxu0
    %v1121 = vadd.f32 %v1072, %v1120
    %1122 = vdwg.mxu0
    %1123 = vmatpush.bf16.msra.mxu0 %v813
    %1124 = vmatpush.bf16.msra.mxu0 %v812
    %1125 = vmatpush.bf16.msra.mxu0 %v811
    %1126 = vmatpush.bf16.msra.mxu0 %v810
    %1127 = vmatpush.bf16.msra.mxu0 %v809
    %1128 = vmatpush.bf16.msra.mxu0 %v808
    %1129 = vmatpush.bf16.msra.mxu0 %v807
    %1130 = vmatpush.bf16.msra.mxu0 %v806
    %1131 = vmatmul.bf16.gmra.mxu0 %v435
    %v1132 = vpop.f32.mrf.mxu0
    %v1133 = vadd.f32 %v1084, %v1132
    %v1134 = vpop.f32.mrf.mxu0
    %v1135 = vadd.f32 %v1086, %v1134
    %1136 = vmatmul.bf16.gmra.mxu0 %v442
    %v1137 = vpop.f32.mrf.mxu0
    %v1138 = vadd.f32 %v1089, %v1137
    %v1139 = vpop.f32.mrf.mxu0
    %v1140 = vadd.f32 %v1091, %v1139
    %1141 = vmatmul.bf16.gmra.mxu0 %v449
    %v1142 = vpop.f32.mrf.mxu0
    %v1143 = vadd.f32 %v1094, %v1142
    %v1144 = vpop.f32.mrf.mxu0
    %v1145 = vadd.f32 %v1096, %v1144
    %1146 = vmatmul.bf16.gmra.mxu0 %v456
    %v1147 = vpop.f32.mrf.mxu0
    %v1148 = vadd.f32 %v1099, %v1147
    %v1149 = vpop.f32.mrf.mxu0
    %v1150 = vadd.f32 %v1101, %v1149
    %1151 = vmatmul.bf16.gmra.mxu0 %v463
    %v1152 = vpop.f32.mrf.mxu0
    %v1153 = vadd.f32 %v1104, %v1152
    %v1154 = vpop.f32.mrf.mxu0
    %v1155 = vadd.f32 %v1106, %v1154
    %1156 = vmatmul.bf16.gmra.mxu0 %v470
    %v1157 = vpop.f32.mrf.mxu0
    %v1158 = vadd.f32 %v1109, %v1157
    %v1159 = vpop.f32.mrf.mxu0
    %v1160 = vadd.f32 %v1111, %v1159
    %1161 = vmatmul.bf16.gmra.mxu0 %v477
    %v1162 = vpop.f32.mrf.mxu0
    %v1163 = vadd.f32 %v1114, %v1162
    %v1164 = vpop.f32.mrf.mxu0
    %v1165 = vadd.f32 %v1116, %v1164
    %1166 = vmatmul.bf16.gmra.mxu0 %v484
    %v1167 = vpop.f32.mrf.mxu0
    %v1168 = vadd.f32 %v1119, %v1167
    %v1169 = vpop.f32.mrf.mxu0
    %v1170 = vadd.f32 %v1121, %v1169
    %1171 = vdwg.mxu0
    %1172 = vmatpush.bf16.msra.mxu0 %v821
    %1173 = vmatpush.bf16.msra.mxu0 %v820
    %1174 = vmatpush.bf16.msra.mxu0 %v819
    %1175 = vmatpush.bf16.msra.mxu0 %v818
    %1176 = vmatpush.bf16.msra.mxu0 %v817
    %1177 = vmatpush.bf16.msra.mxu0 %v816
    %1178 = vmatpush.bf16.msra.mxu0 %v815
    %1179 = vmatpush.bf16.msra.mxu0 %v814
    %1180 = vmatmul.bf16.gmra.mxu0 %v436
    %v1181 = vpop.f32.mrf.mxu0
    %v1182 = vadd.f32 %v1133, %v1181
    %v1183 = vpop.f32.mrf.mxu0
    %v1184 = vadd.f32 %v1135, %v1183
    %1185 = vmatmul.bf16.gmra.mxu0 %v443
    %v1186 = vpop.f32.mrf.mxu0
    %v1187 = vadd.f32 %v1138, %v1186
    %v1188 = vpop.f32.mrf.mxu0
    %v1189 = vadd.f32 %v1140, %v1188
    %1190 = vmatmul.bf16.gmra.mxu0 %v450
    %v1191 = vpop.f32.mrf.mxu0
    %v1192 = vadd.f32 %v1143, %v1191
    %v1193 = vpop.f32.mrf.mxu0
    %v1194 = vadd.f32 %v1145, %v1193
    %1195 = vmatmul.bf16.gmra.mxu0 %v457
    %v1196 = vpop.f32.mrf.mxu0
    %v1197 = vadd.f32 %v1148, %v1196
    %v1198 = vpop.f32.mrf.mxu0
    %v1199 = vadd.f32 %v1150, %v1198
    %1200 = vmatmul.bf16.gmra.mxu0 %v464
    %v1201 = vpop.f32.mrf.mxu0
    %v1202 = vadd.f32 %v1153, %v1201
    %v1203 = vpop.f32.mrf.mxu0
    %v1204 = vadd.f32 %v1155, %v1203
    %1205 = vmatmul.bf16.gmra.mxu0 %v471
    %v1206 = vpop.f32.mrf.mxu0
    %v1207 = vadd.f32 %v1158, %v1206
    %v1208 = vpop.f32.mrf.mxu0
    %v1209 = vadd.f32 %v1160, %v1208
    %1210 = vmatmul.bf16.gmra.mxu0 %v478
    %v1211 = vpop.f32.mrf.mxu0
    %v1212 = vadd.f32 %v1163, %v1211
    %v1213 = vpop.f32.mrf.mxu0
    %v1214 = vadd.f32 %v1165, %v1213
    %1215 = vmatmul.bf16.gmra.mxu0 %v485
    %v1216 = vpop.f32.mrf.mxu0
    %v1217 = vadd.f32 %v1168, %v1216
    %v1218 = vpop.f32.mrf.mxu0
    %v1219 = vadd.f32 %v1170, %v1218
    %1220 = vdwg.mxu0
    %v1221 = vadd.f32 %v1182, %v1184
    %v1222 = vadd.f32 %v1221, %v1187
    %v1223 = vadd.f32 %v1222, %v1189
    %v1224 = vadd.f32 %v1223, %v1192
    %v1225 = vadd.f32 %v1224, %v1194
    %v1226 = vadd.f32 %v1225, %v1197
    %v1227 = vadd.f32 %v1226, %v1199
    %v1228 = vadd.f32 %v1227, %v1202
    %v1229 = vadd.f32 %v1228, %v1204
    %v1230 = vadd.f32 %v1229, %v1207
    %v1231 = vadd.f32 %v1230, %v1209
    %v1232 = vadd.f32 %v1231, %v1212
    %v1233 = vadd.f32 %v1232, %v1214
    %v1234 = vadd.f32 %v1233, %v1217
    %v1235 = vadd.f32 %v1234, %v1219
    %v1236 = vrot.slane %v1235, 4
    %v1237 = vadd.f32 %v1235, %v1236
    %v1238 = vrot.slane %v1237, 2
    %v1239 = vadd.f32 %v1237, %v1238
    %v1240 = vrot.slane %v1239, 1
    %v1241 = vadd.f32 %v1239, %v1240
    %v1242 = vrcp.pop 128.0
    %v1243 = vmul.f32 128.0, %v1242
    %v1244 = vsub.f32 1.0, %v1243
    %v1245 = vmul.f32 %v1242, %v1244
    %v1246 = vadd.f32 %v1242, %v1245
    %vm1247 = vweird.f32 %v1242
    %v1248 = vsel %vm1247, %v1242, %v1246
    %v1249 = vmul.f32 %v1241, %v1248
    %v1250 = vsub.f32 %v1182, %v1249
    %v1251 = vsub.f32 %v1184, %v1249
    %v1252 = vsub.f32 %v1187, %v1249
    %v1253 = vsub.f32 %v1189, %v1249
    %v1254 = vsub.f32 %v1192, %v1249
    %v1255 = vsub.f32 %v1194, %v1249
    %v1256 = vsub.f32 %v1197, %v1249
    %v1257 = vsub.f32 %v1199, %v1249
    %v1258 = vsub.f32 %v1202, %v1249
    %v1259 = vsub.f32 %v1204, %v1249
    %v1260 = vsub.f32 %v1207, %v1249
    %v1261 = vsub.f32 %v1209, %v1249
    %v1262 = vsub.f32 %v1212, %v1249
    %v1263 = vsub.f32 %v1214, %v1249
    %v1264 = vsub.f32 %v1217, %v1249
    %v1265 = vsub.f32 %v1219, %v1249
    %v1266 = vmul.f32 %v1250, %v1250
    %v1267 = vmul.f32 %v1251, %v1251
    %v1268 = vmul.f32 %v1252, %v1252
    %v1269 = vmul.f32 %v1253, %v1253
    %v1270 = vmul.f32 %v1254, %v1254
    %v1271 = vmul.f32 %v1255, %v1255
    %v1272 = vmul.f32 %v1256, %v1256
    %v1273 = vmul.f32 %v1257, %v1257
    %v1274 = vmul.f32 %v1258, %v1258
    %v1275 = vmul.f32 %v1259, %v1259
    %v1276 = vmul.f32 %v1260, %v1260
    %v1277 = vmul.f32 %v1261, %v1261
    %v1278 = vmul.f32 %v1262, %v1262
    %v1279 = vmul.f32 %v1263, %v1263
    %v1280 = vmul.f32 %v1264, %v1264
    %v1281 = vmul.f32 %v1265, %v1265
    %v1282 = vadd.f32 %v1266, %v1267
    %v1283 = vadd.f32 %v1282, %v1268
    %v1284 = vadd.f32 %v1283, %v1269
    %v1285 = vadd.f32 %v1284, %v1270
    %v1286 = vadd.f32 %v1285, %v1271
    %v1287 = vadd.f32 %v1286, %v1272
    %v1288 = vadd.f32 %v1287, %v1273
    %v1289 = vadd.f32 %v1288, %v1274
    %v1290 = vadd.f32 %v1289, %v1275
    %v1291 = vadd.f32 %v1290, %v1276
    %v1292 = vadd.f32 %v1291, %v1277
    %v1293 = vadd.f32 %v1292, %v1278
    %v1294 = vadd.f32 %v1293, %v1279
    %v1295 = vadd.f32 %v1294, %v1280
    %v1296 = vadd.f32 %v1295, %v1281
    %v1297 = vrot.slane %v1296, 4
    %v1298 = vadd.f32 %v1296, %v1297
    %v1299 = vrot.slane %v1298, 2
    %v1300 = vadd.f32 %v1298, %v1299
    %v1301 = vrot.slane %v1300, 1
    %v1302 = vadd.f32 %v1300, %v1301
    %v1303 = vmul.f32 %v1302, %v1248
    %v1304 = vadd.f32 %v1303, 1e-05
    %v1305 = vrsqrt.pop %v1304
    %v1306 = vmul.f32 %v1305, %v1304
    %v1307 = vmul.f32 %v1306, %v1305
    %v1308 = vmul.f32 0.5, %v1307
    %v1309 = vsub.f32 1.5, %v1308
    %v1310 = vmul.f32 %v1305, %v1309
    %vm1311 = vweird.f32 %v1304
    %vm1312 = vweird.f32 %v1305
    %vm1313 = vmor %vm1311, %vm1312
    %v1314 = vsel %vm1313, %v1305, %v1310
    %v1315 = vmul.f32 %v1250, %v1314
    %v1316 = vmul.f32 %v1251, %v1314
    %v1317 = vmul.f32 %v1252, %v1314
    %v1318 = vmul.f32 %v1253, %v1314
    %v1319 = vmul.f32 %v1254, %v1314
    %v1320 = vmul.f32 %v1255, %v1314
    %v1321 = vmul.f32 %v1256, %v1314
    %v1322 = vmul.f32 %v1257, %v1314
    %v1323 = vmul.f32 %v1258, %v1314
    %v1324 = vmul.f32 %v1259, %v1314
    %v1325 = vmul.f32 %v1260, %v1314
    %v1326 = vmul.f32 %v1261, %v1314
    %v1327 = vmul.f32 %v1262, %v1314
    %v1328 = vmul.f32 %v1263, %v1314
    %v1329 = vmul.f32 %v1264, %v1314
    %v1330 = vmul.f32 %v1265, %v1314
    %v1331 = vld [vmem:[%s3] sm:$0x1]
    %v1333 = vperm.slane %v1331, 0
    %v1335 = vmul.f32 %v1315, %v1333
    %v1336 = vmul.f32 %v1316, %v1333
    %v1337 = vmul.f32 %v1317, %v1333
    %v1338 = vmul.f32 %v1318, %v1333
    %v1339 = vmul.f32 %v1319, %v1333
    %v1340 = vmul.f32 %v1320, %v1333
    %v1341 = vmul.f32 %v1321, %v1333
    %v1342 = vmul.f32 %v1322, %v1333
    %v1343 = vmul.f32 %v1323, %v1333
    %v1344 = vmul.f32 %v1324, %v1333
    %v1345 = vmul.f32 %v1325, %v1333
    %v1346 = vmul.f32 %v1326, %v1333
    %v1347 = vmul.f32 %v1327, %v1333
    %v1348 = vmul.f32 %v1328, %v1333
    %v1349 = vmul.f32 %v1329, %v1333
    %v1350 = vmul.f32 %v1330, %v1333
    %v1351 = vld [vmem:[%s4] sm:$0x1]
    %v1353 = vperm.slane %v1351, 0
    %v1355 = vadd.f32 %v1335, %v1353
    %v1356 = vadd.f32 %v1336, %v1353
    %v1357 = vadd.f32 %v1337, %v1353
    %v1358 = vadd.f32 %v1338, %v1353
    %v1359 = vadd.f32 %v1339, %v1353
    %v1360 = vadd.f32 %v1340, %v1353
    %v1361 = vadd.f32 %v1341, %v1353
    %v1362 = vadd.f32 %v1342, %v1353
    %v1363 = vadd.f32 %v1343, %v1353
    %v1364 = vadd.f32 %v1344, %v1353
    %v1365 = vadd.f32 %v1345, %v1353
    %v1366 = vadd.f32 %v1346, %v1353
    %v1367 = vadd.f32 %v1347, %v1353
    %v1368 = vadd.f32 %v1348, %v1353
    %v1369 = vadd.f32 %v1349, %v1353
    %v1370 = vadd.f32 %v1350, %v1353
    %v1371 = vmax.f32 %v1355, 0.0
    %v1372 = vmax.f32 %v1356, 0.0
    %v1373 = vmax.f32 %v1357, 0.0
    %v1374 = vmax.f32 %v1358, 0.0
    %v1375 = vmax.f32 %v1359, 0.0
    %v1376 = vmax.f32 %v1360, 0.0
    %v1377 = vmax.f32 %v1361, 0.0
    %v1378 = vmax.f32 %v1362, 0.0
    %v1379 = vmax.f32 %v1363, 0.0
    %v1380 = vmax.f32 %v1364, 0.0
    %v1381 = vmax.f32 %v1365, 0.0
    %v1382 = vmax.f32 %v1366, 0.0
    %v1383 = vmax.f32 %v1367, 0.0
    %v1384 = vmax.f32 %v1368, 0.0
    %v1385 = vmax.f32 %v1369, 0.0
    %v1386 = vmax.f32 %v1370, 0.0
    %v1387 = vpack.c.bf16 %v1372, %v1371
    %v1388 = vpack.c.bf16 %v1374, %v1373
    %v1389 = vpack.c.bf16 %v1376, %v1375
    %v1390 = vpack.c.bf16 %v1378, %v1377
    %v1391 = vpack.c.bf16 %v1380, %v1379
    %v1392 = vpack.c.bf16 %v1382, %v1381
    %v1393 = vpack.c.bf16 %v1384, %v1383
    %v1394 = vpack.c.bf16 %v1386, %v1385
    %v1395 = vld [vmem:[#allocation7] sm:$0xf]
    %v1396 = vld [vmem:[#allocation7 + $0x4] sm:$0xf]
    %v1397 = vld [vmem:[#allocation7 + $0x8] sm:$0xf]
    %v1398 = vld [vmem:[#allocation7 + $0xc] sm:$0xf]
    %v1399 = vld [vmem:[#allocation7 + $0x10] sm:$0xf]
    %v1400 = vld [vmem:[#allocation7 + $0x14] sm:$0xf]
    %v1401 = vld [vmem:[#allocation7 + $0x18] sm:$0xf]
    %v1402 = vld [vmem:[#allocation7 + $0x1c] sm:$0xf]
    %v1403 = vld [vmem:[#allocation7 + $0x20] sm:$0xf]
    %v1404 = vld [vmem:[#allocation7 + $0x24] sm:$0xf]
    %v1405 = vld [vmem:[#allocation7 + $0x28] sm:$0xf]
    %v1406 = vld [vmem:[#allocation7 + $0x2c] sm:$0xf]
    %v1407 = vld [vmem:[#allocation7 + $0x30] sm:$0xf]
    %v1408 = vld [vmem:[#allocation7 + $0x34] sm:$0xf]
    %v1409 = vld [vmem:[#allocation7 + $0x38] sm:$0xf]
    %v1410 = vld [vmem:[#allocation7 + $0x3c] sm:$0xf]
    %v1411 = vld [vmem:[%s6] sm:$0x1]
    %v1413 = vperm.slane %v1411, 0
    %v1431 = vunpack.c.l.b16 %v1395
    %v1432 = vunpack.c.l.b16 %v1396
    %v1433 = vunpack.c.l.b16 %v1397
    %v1434 = vunpack.c.l.b16 %v1398
    %v1435 = vunpack.c.l.b16 %v1399
    %v1436 = vunpack.c.l.b16 %v1400
    %v1437 = vunpack.c.l.b16 %v1401
    %v1438 = vunpack.c.l.b16 %v1402
    %v1439 = vunpack.c.l.b16 %v1403
    %v1440 = vunpack.c.l.b16 %v1404
    %v1441 = vunpack.c.l.b16 %v1405
    %v1442 = vunpack.c.l.b16 %v1406
    %v1443 = vunpack.c.l.b16 %v1407
    %v1444 = vunpack.c.l.b16 %v1408
    %v1445 = vunpack.c.l.b16 %v1409
    %v1446 = vunpack.c.l.b16 %v1410
    %v1447 = vpack.c.b16 %v1432, %v1431
    %v1448 = vpack.c.b16 %v1434, %v1433
    %v1449 = vpack.c.b16 %v1436, %v1435
    %v1450 = vpack.c.b16 %v1438, %v1437
    %v1451 = vpack.c.b16 %v1440, %v1439
    %v1452 = vpack.c.b16 %v1442, %v1441
    %v1453 = vpack.c.b16 %v1444, %v1443
    %v1454 = vpack.c.b16 %v1446, %v1445
    %1463 = vmatpush.bf16.msra.mxu0 %v1454
    %1464 = vmatpush.bf16.msra.mxu0 %v1453
    %1465 = vmatpush.bf16.msra.mxu0 %v1452
    %1466 = vmatpush.bf16.msra.mxu0 %v1451
    %1467 = vmatpush.bf16.msra.mxu0 %v1450
    %1468 = vmatpush.bf16.msra.mxu0 %v1449
    %1469 = vmatpush.bf16.msra.mxu0 %v1448
    %1470 = vmatpush.bf16.msra.mxu0 %v1447
    %1471 = vmatmul.bf16.gmra.mxu0 %v1387
    %v1472 = vpop.f32.mrf.mxu0
    %v1473 = vadd.f32 %v1413, %v1472
    %v1474 = vpop.f32.mrf.mxu0
    %v1475 = vadd.f32 %v1413, %v1474
    %1476 = vmatmul.bf16.gmra.mxu0 %v1388
    %v1477 = vpop.f32.mrf.mxu0
    %v1478 = vadd.f32 %v1413, %v1477
    %v1479 = vpop.f32.mrf.mxu0
    %v1480 = vadd.f32 %v1413, %v1479
    %1481 = vmatmul.bf16.gmra.mxu0 %v1389
    %v1482 = vpop.f32.mrf.mxu0
    %v1483 = vadd.f32 %v1413, %v1482
    %v1484 = vpop.f32.mrf.mxu0
    %v1485 = vadd.f32 %v1413, %v1484
    %1486 = vmatmul.bf16.gmra.mxu0 %v1390
    %v1487 = vpop.f32.mrf.mxu0
    %v1488 = vadd.f32 %v1413, %v1487
    %v1489 = vpop.f32.mrf.mxu0
    %v1490 = vadd.f32 %v1413, %v1489
    %1491 = vmatmul.bf16.gmra.mxu0 %v1391
    %v1492 = vpop.f32.mrf.mxu0
    %v1493 = vadd.f32 %v1413, %v1492
    %v1494 = vpop.f32.mrf.mxu0
    %v1495 = vadd.f32 %v1413, %v1494
    %1496 = vmatmul.bf16.gmra.mxu0 %v1392
    %v1497 = vpop.f32.mrf.mxu0
    %v1498 = vadd.f32 %v1413, %v1497
    %v1499 = vpop.f32.mrf.mxu0
    %v1500 = vadd.f32 %v1413, %v1499
    %1501 = vmatmul.bf16.gmra.mxu0 %v1393
    %v1502 = vpop.f32.mrf.mxu0
    %v1503 = vadd.f32 %v1413, %v1502
    %v1504 = vpop.f32.mrf.mxu0
    %v1505 = vadd.f32 %v1413, %v1504
    %1506 = vmatmul.bf16.gmra.mxu0 %v1394
    %v1507 = vpop.f32.mrf.mxu0
    %v1508 = vadd.f32 %v1413, %v1507
    %v1509 = vpop.f32.mrf.mxu0
    %v1510 = vadd.f32 %v1413, %v1509
    %1511 = vdwg.mxu0
    %1512 = vst [vmem:[#allocation8] sm:$0xff] %v1473
    %1513 = vst [vmem:[#allocation8 + $0x8] sm:$0xff] %v1475
    %1514 = vst [vmem:[#allocation8 + $0x10] sm:$0xff] %v1478
    %1515 = vst [vmem:[#allocation8 + $0x18] sm:$0xff] %v1480
    %1516 = vst [vmem:[#allocation8 + $0x20] sm:$0xff] %v1483
    %1517 = vst [vmem:[#allocation8 + $0x28] sm:$0xff] %v1485
    %1518 = vst [vmem:[#allocation8 + $0x30] sm:$0xff] %v1488
    %1519 = vst [vmem:[#allocation8 + $0x38] sm:$0xff] %v1490
    %1520 = vst [vmem:[#allocation8 + $0x40] sm:$0xff] %v1493
    %1521 = vst [vmem:[#allocation8 + $0x48] sm:$0xff] %v1495
    %1522 = vst [vmem:[#allocation8 + $0x50] sm:$0xff] %v1498
    %1523 = vst [vmem:[#allocation8 + $0x58] sm:$0xff] %v1500
    %1524 = vst [vmem:[#allocation8 + $0x60] sm:$0xff] %v1503
    %1525 = vst [vmem:[#allocation8 + $0x68] sm:$0xff] %v1505
    %1526 = vst [vmem:[#allocation8 + $0x70] sm:$0xff] %v1508
    %1527 = vst [vmem:[#allocation8 + $0x78] sm:$0xff] %v1510
    // Predicated region
    $region42: #{tpu_custom_call.1} parent=1 // pred_check
      _
    $region43: #{tpu_custom_call.1} parent=1 // pred_check_branch
      %1529 = sbr.rel (0) target = $region45
    $region44: #{tpu_custom_call.1} parent=1 // pred_region
      %1531 = vsyncadd [#allocation4], 0
      %s1532 = sshll.u32 [#allocation8], 4
      %s1533 = int_to_ptr.vmem [resolvable:$true] %s1532
      %s1534 = sshll.u32 %s7, 4
      %s1535 = int_to_ptr.hbm [resolvable:$true] %s1534
      %1540 = dma.vmem_to_hbm [thread:$0]  %s1533, 2048, %s1535, [#allocation4], 128, 128, 8
    $region45: #{tpu_custom_call.1} parent=1 // pred_fallthru
      _
    // Predicated region
    $region46: #{tpu_custom_call.1} parent=1 // pred_check
      _
    $region47: #{tpu_custom_call.1} parent=1 // pred_check_branch
      %1542 = sbr.rel (0) target = $region49
    $region48: #{tpu_custom_call.1} parent=1 // pred_region
      %1544 = dma.done [#allocation4], 2048
    $region49: #{tpu_custom_call.1} parent=1 // pred_fallthru
      _
    %1545 = vsyncpa [#allocation3], 1
    %1546 = vsyncpa [#allocation6], 1
    %1547 = vsyncpa [#allocation4], 1

</llo_original>
